<compile_context>
chip_gen: v7x
topology: tpu7x:2x2x1
jax: 0.10.0
libtpu: 0.0.40
codegen_flags: <defaults>
</compile_context>

<pallas_src>
import jax
import jax.numpy as jnp
from jax import lax
from jax.experimental import pallas as pl
from jax.experimental.pallas import tpu as pltpu


def _round_up(x, m):
    return ((x + m - 1) // m) * m


def _cdiv(a, b):
    return -(-a // b)


def _choose_batch_tile(batch, block_b):
    """Pick a lane-aligned batch tile.

    * tiles are multiples of 128 lanes (lane-dense output stores),
    * capped at round_up(cdiv(B,2),128) so large batches get >=2 grid steps
      (lets v7x shard the batch axis across its two TensorCores),
    * small batches collapse to a single exact block (block dims == array dims).
    """
    cap = _round_up(_cdiv(batch, 2), 128)
    tb = min(int(block_b), cap)
    tb = max(128, (tb // 128) * 128)
    if tb >= batch:
        return batch, 1
    return tb, _cdiv(batch, tb)


def mlp_kernel(x_ref, w1_ref, bw_ref, b2_ref, o_ref):
    # x_ref : [TB, D_in]  streamed batch tile, native [B, D_in] HBM layout
    # w1_ref: [H, D_in]   resident in VMEM (constant index_map), torch layout
    # bw_ref: [H, 2]      column 0 = b1, column 1 = w2 (f32, resident)
    # b2_ref: [1]         SMEM scalar
    # o_ref : [1, TB]     lane-dense output row
    x = x_ref[...]
    w1 = w1_ref[...]

    # h^T = relu(W1 @ x^T + b1) -> [H, TB]; contraction over D_in of both
    # operands (no wrapper-side transpose of x), f32 accumulation on the MXU.
    h = lax.dot_general(
        w1, x,
        dimension_numbers=(((1,), (1,)), ((), ())),
        preferred_element_type=jnp.float32,
    )
    b1 = bw_ref[:, 0:1]   # [H, 1]
    w2 = bw_ref[:, 1:2]   # [H, 1]
    h = jnp.maximum(h + b1, 0.0)

    # Layer 2 (H -> 1) as a VPU multiply + sublane (XLU) reduction: keeps the
    # result lane-dense and avoids a degenerate N=1 MXU pass.
    z = jnp.sum(h * w2, axis=0, keepdims=True) + b2_ref[0]

    o_ref[...] = jax.nn.sigmoid(z).astype(o_ref.dtype)


def neural_net_forward(x, w1, b1, w2, b2, *, block_b=16384):
    """Forward pass of Linear(D_in,H) -> ReLU -> Linear(H,1) -> Sigmoid.

    x : [B, D_in]  (f32 or bf16; streamed in its native dtype — pass bf16 to
                    halve HBM traffic, accumulation is always f32)
    w1: [H, D_in]  (torch layout),  b1: [H]
    w2: [1, H]     (torch layout),  b2: [1]
    returns [B, 1] in x.dtype
    """
    B, d_in = x.shape
    H = w1.shape[0]
    tb, steps = _choose_batch_tile(B, block_b)

    w1_c = w1.astype(x.dtype)                                   # MXU operand dtype
    bw = jnp.concatenate(
        [b1.reshape(H, 1), w2.reshape(H, 1)], axis=1).astype(jnp.float32)
    b2_s = b2.reshape(1).astype(jnp.float32)

    itemsize = x.dtype.itemsize
    cost = pl.CostEstimate(
        flops=2 * B * d_in * H + 4 * B * H,
        transcendentals=2 * B,  # sigmoid ~ exp + reciprocal per sample
        bytes_accessed=(B * d_in + H * d_in) * itemsize
        + (H * 2 + 1) * 4
        + B * itemsize,
    )

    out = pl.pallas_call(
        mlp_kernel,
        out_shape=jax.ShapeDtypeStruct((1, B), x.dtype),
        grid=(steps,),
        in_specs=[
            pl.BlockSpec((tb, d_in), lambda i: (i, 0)),          # x tiles streamed
            pl.BlockSpec((H, d_in), lambda i: (0, 0)),           # W1 resident
            pl.BlockSpec((H, 2), lambda i: (0, 0)),              # [b1 | w2] resident
            pl.BlockSpec(memory_space=pltpu.MemorySpace.SMEM),   # b2 scalar in SMEM
        ],
        out_specs=pl.BlockSpec((1, tb), lambda i: (0, i)),        # lane-dense row
        compiler_params=pltpu.CompilerParams(
            dimension_semantics=("parallel",),
            vmem_limit_bytes=32 * 1024 * 1024,
        ),
        cost_estimate=cost,
    )(x, w1_c, bw, b2_s)

    # Back to the torch output layout [B, 1].
    return out.reshape(B, 1)


def init_params(key, input_size, hidden_size):
    """Torch-layout params, torch.nn.Linear default init U[-1/sqrt(fan_in), +]."""
    k1, k2, k3, k4 = jax.random.split(key, 4)
    bound1 = 1.0 / jnp.sqrt(input_size)
    bound2 = 1.0 / jnp.sqrt(hidden_size)
    w1 = jax.random.uniform(k1, (hidden_size, input_size), jnp.float32, -bound1, bound1)
    b1 = jax.random.uniform(k2, (hidden_size,), jnp.float32, -bound1, bound1)
    w2 = jax.random.uniform(k3, (1, hidden_size), jnp.float32, -bound2, bound2)
    b2 = jax.random.uniform(k4, (1,), jnp.float32, -bound2, bound2)
    return w1, b1, w2, b2


if __name__ == "__main__":
    input_size, hidden_size = 16, 32
    key = jax.random.PRNGKey(0)
    kx, kp, kx2 = jax.random.split(key, 3)
    w1, b1, w2, b2 = init_params(kp, input_size, hidden_size)

    def ref_forward(x):
        xf = x.astype(jnp.float32)
        h = jnp.maximum(xf @ w1.T + b1, 0.0)
        return jax.nn.sigmoid(h @ w2.T + b2)

    # Small batch, f32: single exact block (grid of 1 step).
    x_small = jax.random.normal(kx, (8, input_size), jnp.float32)
    out_small = neural_net_forward(x_small, w1, b1, w2, b2)
    jax.block_until_ready(out_small)
    assert out_small.shape == (8, 1)
    assert jnp.allclose(out_small, ref_forward(x_small), atol=1e-5, rtol=1e-5)

    # Larger, non-divisible batch, f32: multi-step grid with a clipped edge
    # block (no wrapper-side padding of x).
    x_big = jax.random.normal(kx2, (300, input_size), jnp.float32)
    out_big = neural_net_forward(x_big, w1, b1, w2, b2, block_b=128)
    jax.block_until_ready(out_big)
    assert out_big.shape == (300, 1)
    assert jnp.allclose(out_big, ref_forward(x_big), atol=1e-5, rtol=1e-5)

    # bf16 streaming path (halves HBM bytes on the only large operand); f32
    # accumulation keeps the error small, tolerances loosened accordingly.
    x_bf16 = x_big.astype(jnp.bfloat16)
    out_bf16 = neural_net_forward(x_bf16, w1, b1, w2, b2)
    jax.block_until_ready(out_bf16)
    assert out_bf16.shape == (300, 1)
    assert jnp.allclose(out_bf16.astype(jnp.float32), ref_forward(x_bf16),
                        atol=2e-2, rtol=2e-2)

    print("KERNEL_OK")
</pallas_src>

<mosaic_0001>
module attributes {stable_mosaic.version = 11 : i64} {
  func.func @mlp_kernel(%arg0: i32, %arg1: memref<8x16xf32, #tpu.memory_space<vmem>>, %arg2: memref<32x16xf32, #tpu.memory_space<vmem>>, %arg3: memref<32x2xf32, #tpu.memory_space<vmem>>, %arg4: memref<1xf32, #tpu.memory_space<smem>>, %arg5: memref<1x8xf32, #tpu.memory_space<vmem>>) attributes {dimension_semantics = [#tpu.dimension_semantics<parallel>], iteration_bounds = array<i64: 1>, scalar_prefetch = 0 : i64, scratch_operands = 0 : i64, tpu.core_type = #tpu.core_type<tc>, window_params = [{transform_indices = @transform_0, window_bounds = array<i64: 8, 16>}, {pipeline_mode = #tpu.pipeline_mode<synchronous>, transform_indices = @transform_1, window_bounds = array<i64: 32, 16>}, {pipeline_mode = #tpu.pipeline_mode<synchronous>, transform_indices = @transform_2, window_bounds = array<i64: 32, 2>}, {transform_indices = @transform_3, window_bounds = array<i64: 1>}, {transform_indices = @transform_4, window_bounds = array<i64: 1, 8>}]} {
    %c0 = arith.constant 0 : index
    %c0_0 = arith.constant 0 : index
    %0 = vector.load %arg1[%c0, %c0_0] : memref<8x16xf32, #tpu.memory_space<vmem>>, vector<8x16xf32>
    %c0_1 = arith.constant 0 : index
    %c0_2 = arith.constant 0 : index
    %1 = vector.load %arg2[%c0_1, %c0_2] : memref<32x16xf32, #tpu.memory_space<vmem>>, vector<32x16xf32>
    %cst = arith.constant dense<0.000000e+00> : vector<32x8xf32>
    %2 = tpu.matmul %1, %0, %cst {dimension_numbers = #tpu.dot_dimension_numbers<[1], [1], [0], [0], [0, 0, 1, 0], [], []>} : vector<32x16xf32>, vector<8x16xf32>, vector<32x8xf32> -> vector<32x8xf32>
    %c0_3 = arith.constant 0 : index
    %c0_4 = arith.constant 0 : index
    %3 = vector.load %arg3[%c0_3, %c0_4] : memref<32x2xf32, #tpu.memory_space<vmem>>, vector<32x1xf32>
    %c0_5 = arith.constant 0 : index
    %c1 = arith.constant 1 : index
    %4 = vector.load %arg3[%c0_5, %c1] : memref<32x2xf32, #tpu.memory_space<vmem>>, vector<32x1xf32>
    %5 = vector.broadcast %3 : vector<32x1xf32> to vector<32x8xf32>
    %6 = arith.addf %2, %5 : vector<32x8xf32>
    %cst_6 = arith.constant 0.000000e+00 : f32
    %7 = vector.broadcast %cst_6 : f32 to vector<32x8xf32>
    %8 = arith.maximumf %6, %7 : vector<32x8xf32>
    %9 = vector.broadcast %4 : vector<32x1xf32> to vector<32x8xf32>
    %10 = arith.mulf %8, %9 : vector<32x8xf32>
    %cst_7 = arith.constant dense<0.000000e+00> : vector<8xf32>
    %11 = vector.multi_reduction <add>, %10, %cst_7 [0] : vector<32x8xf32> to vector<8xf32>
    %12 = vector.shape_cast %11 : vector<8xf32> to vector<1x8xf32>
    %c0_8 = arith.constant 0 : index
    %13 = memref.load %arg4[%c0_8] : memref<1xf32, #tpu.memory_space<smem>>
    %14 = vector.broadcast %13 : f32 to vector<1x8xf32>
    %15 = arith.addf %12, %14 : vector<1x8xf32>
    %16 = arith.negf %15 : vector<1x8xf32>
    %17 = math.exp %16 : vector<1x8xf32>
    %cst_9 = arith.constant 1.000000e+00 : f32
    %18 = vector.broadcast %cst_9 : f32 to vector<1x8xf32>
    %19 = arith.addf %18, %17 : vector<1x8xf32>
    %20 = arith.divf %18, %19 : vector<1x8xf32>
    %c0_10 = arith.constant 0 : index
    %c0_11 = arith.constant 0 : index
    %21 = vector.load %arg5[%c0_10, %c0_11] : memref<1x8xf32, #tpu.memory_space<vmem>>, vector<1x8xf32>
    tpu.vector_store %arg5[%c0_10, %c0_11], %20 {strides = array<i32>} : memref<1x8xf32, #tpu.memory_space<vmem>>, vector<1x8xf32>,
    return
  }
  func.func @transform_0(%arg0: i32) -> (i32, i32) {
    %c0_i32 = arith.constant 0 : i32
    %c0_i32_0 = arith.constant 0 : i32
    return %arg0, %c0_i32 : i32, i32
  }
  func.func @transform_1(%arg0: i32) -> (i32, i32) {
    %c0_i32 = arith.constant 0 : i32
    %c0_i32_0 = arith.constant 0 : i32
    %c0_i32_1 = arith.constant 0 : i32
    return %c0_i32, %c0_i32_0 : i32, i32
  }
  func.func @transform_2(%arg0: i32) -> (i32, i32) {
    %c0_i32 = arith.constant 0 : i32
    %c0_i32_0 = arith.constant 0 : i32
    %c0_i32_1 = arith.constant 0 : i32
    return %c0_i32, %c0_i32_0 : i32, i32
  }
  func.func @transform_3(%arg0: i32) -> i32 {
    %c0_i32 = arith.constant 0 : i32
    %c0_i32_0 = arith.constant 0 : i32
    return %c0_i32 : i32
  }
  func.func @transform_4(%arg0: i32) -> (i32, i32) {
    %c0_i32 = arith.constant 0 : i32
    %c0_i32_0 = arith.constant 0 : i32
    return %c0_i32, %arg0 : i32, i32
  }
}

</mosaic_0001>

<llo_original>
// kernel: tpu_custom_call.1
$region0: #{tpu_custom_call.1}
  #allocation0 [shape = 'u32[]', space=smem, size = 0x4, offset = 0x4, fixed_abs, tag = 'smem constant byte address 0x4 - core index']
  #allocation1 [shape = 'u32[144,128]{1,0:T(1,128)}', space=vmem, size = 0x12000, scoped, tag = 'internal scratch']
  #allocation2 [shape = 'f32[1]{0:T(128)S(6)}', space=smem, size = 0x200, scoped, tag = 'scoped memory for tpu_custom_call.1']
  %s0 = inlined_call_operand.vmem [shape: f32[8,16], index: 0, kind: input, shape index: {}]
  %s1 = inlined_call_operand.vmem [shape: f32[32,16], index: 1, kind: input, shape index: {}]
  %s2 = inlined_call_operand.vmem [shape: f32[32,2], index: 2, kind: input, shape index: {}]
  %s3 = inlined_call_operand.<no memory space> [shape: f32[1], index: 3, kind: input, shape index: {}]
  %s4 = inlined_call_operand.hbm [shape: f32[1,8], index: 4, kind: output, shape index: {}]
  %s5 = sld [smem:[#allocation0]]
  $region26: #{tpu_custom_call.1} parent=0
    _
  %s7 = ssub.s32 1, %s5
  %s8 = scalar_select 0, %s7, %s5
  %9 = sst [smem:[#allocation2]] %s3
  $region1: #{tpu_custom_call.1} parent=0
    #allocation3 [shape = 'u8[512]{0}', space=vmem, size = 0x400, scoped, tag = 'output window, operand 0, single buffered']
    #allocation4 [shape = 's32[1]{0}', space=sflag, size = 0x4, scoped, tag = 'scoped memory for tpu_custom_call.1']
    %10 = vsyncpa [#allocation4], 0
    // Predicated region
    $region2: #{tpu_custom_call.1} parent=1 // pred_check
      _
    $region3: #{tpu_custom_call.1} parent=1 // pred_check_branch
      %12 = sbr.rel (0) target = $region5
    $region4: #{tpu_custom_call.1} parent=1 // pred_region
      _
    $region5: #{tpu_custom_call.1} parent=1 // pred_fallthru
      _
    // Predicated region
    $region6: #{tpu_custom_call.1} parent=1 // pred_check
      _
    $region7: #{tpu_custom_call.1} parent=1 // pred_check_branch
      %14 = sbr.rel (0) target = $region9
    $region8: #{tpu_custom_call.1} parent=1 // pred_region
      _
    $region9: #{tpu_custom_call.1} parent=1 // pred_fallthru
      _
    // Predicated region
    $region10: #{tpu_custom_call.1} parent=1 // pred_check
      _
    $region11: #{tpu_custom_call.1} parent=1 // pred_check_branch
      %16 = sbr.rel (0) target = $region13
    $region12: #{tpu_custom_call.1} parent=1 // pred_region
      _
    $region13: #{tpu_custom_call.1} parent=1 // pred_fallthru
      _
    // Predicated region
    $region14: #{tpu_custom_call.1} parent=1 // pred_check
      _
    $region15: #{tpu_custom_call.1} parent=1 // pred_check_branch
      %18 = sbr.rel (0) target = $region17
    $region16: #{tpu_custom_call.1} parent=1 // pred_region
      _
    $region17: #{tpu_custom_call.1} parent=1 // pred_fallthru
      _
    %v19 = vld [vmem:[%s0] sm:$0xff]
    %v20 = vld [vmem:[%s1] sm:$0xff]
    %v21 = vld [vmem:[%s1 + $0x8] sm:$0xff]
    %v22 = vld [vmem:[%s1 + $0x10] sm:$0xff]
    %v23 = vld [vmem:[%s1 + $0x18] sm:$0xff]
    %v24 = vld [vmem:[%s2] sm:$0xff]
    %v25 = vld [vmem:[%s2 + $0x8] sm:$0xff]
    %v26 = vld [vmem:[%s2 + $0x10] sm:$0xff]
    %v27 = vld [vmem:[%s2 + $0x18] sm:$0xff]
    %29 = vset.pattern.permute.xlu0 0
    %30 = vperm.xlu0 %29, %v24
    %v31 = vpop.permute.xlu0 %30
    %34 = vset.pattern.permute.xlu0 0
    %35 = vperm.xlu0 %34, %v25
    %v36 = vpop.permute.xlu0 %35
    %39 = vset.pattern.permute.xlu0 0
    %40 = vperm.xlu0 %39, %v26
    %v41 = vpop.permute.xlu0 %40
    %44 = vset.pattern.permute.xlu0 0
    %45 = vperm.xlu0 %44, %v27
    %v46 = vpop.permute.xlu0 %45
    %vm48 = vcmask 130048
    %v50 = vsel %vm48, %v20, 0
    %v53 = vsel %vm48, %v21, 0
    %v56 = vsel %vm48, %v22, 0
    %v59 = vsel %vm48, %v23, 0
    %v62 = vsel %vm48, %v19, 0
    %64 = vmatprep.subr.mxu0 0.0
    %65 = vmatpush1.xpose.msra.mxu0 %v62
    %66 = vmatprep.subr.mxu0 0.0
    %67 = vmatpush1.xpose.msra.mxu0 0.0
    %68 = vmatprep.subr.mxu0 0.0
    %69 = vmatpush1.xpose.msra.mxu0 0.0
    %70 = vmatprep.subr.mxu0 0.0
    %71 = vmatpush1.xpose.msra.mxu0 0.0
    %72 = vmatprep.subr.mxu0 0.0
    %73 = vmatpush1.xpose.msra.mxu0 0.0
    %74 = vmatprep.subr.mxu0 0.0
    %75 = vmatpush1.xpose.msra.mxu0 0.0
    %76 = vmatprep.subr.mxu0 0.0
    %77 = vmatpush1.xpose.msra.mxu0 0.0
    %78 = vmatprep.subr.mxu0 0.0
    %79 = vmatpush1.xpose.msra.mxu0 0.0
    %80 = vmatprep.subr.mxu0 0.0
    %81 = vmatpush1.xpose.msra.mxu0 0.0
    %82 = vmatprep.subr.mxu0 0.0
    %83 = vmatpush1.xpose.msra.mxu0 0.0
    %84 = vmatprep.subr.mxu0 0.0
    %85 = vmatpush1.xpose.msra.mxu0 0.0
    %86 = vmatprep.subr.mxu0 0.0
    %87 = vmatpush1.xpose.msra.mxu0 0.0
    %88 = vmatprep.subr.mxu0 0.0
    %89 = vmatpush1.xpose.msra.mxu0 0.0
    %90 = vmatprep.subr.mxu0 0.0
    %91 = vmatpush1.xpose.msra.mxu0 0.0
    %92 = vmatprep.subr.mxu0 0.0
    %93 = vmatpush1.xpose.msra.mxu0 0.0
    %94 = vmatprep.subr.mxu0 0.0
    %95 = vmatpush1.xpose.msra.mxu0 0.0
    %96 = vmatprep.subr.mxu0 0.0
    %97 = vmatpush1.xpose.msra.mxu0 0.0
    %98 = vmatprep.subr.mxu0 0.0
    %99 = vmatpush1.xpose.msra.mxu0 0.0
    %100 = vmatprep.subr.mxu0 0.0
    %101 = vmatpush1.xpose.msra.mxu0 0.0
    %102 = vmatprep.subr.mxu0 0.0
    %103 = vmatpush1.xpose.msra.mxu0 0.0
    %104 = vmatprep.subr.mxu0 0.0
    %105 = vmatpush1.xpose.msra.mxu0 0.0
    %106 = vmatprep.subr.mxu0 0.0
    %107 = vmatpush1.xpose.msra.mxu0 0.0
    %108 = vmatprep.subr.mxu0 0.0
    %109 = vmatpush1.xpose.msra.mxu0 0.0
    %110 = vmatprep.subr.mxu0 0.0
    %111 = vmatpush1.xpose.msra.mxu0 0.0
    %112 = vmatprep.subr.mxu0 0.0
    %113 = vmatpush1.xpose.msra.mxu0 0.0
    %114 = vmatprep.subr.mxu0 0.0
    %115 = vmatpush1.xpose.msra.mxu0 0.0
    %116 = vmatprep.subr.mxu0 0.0
    %117 = vmatpush1.xpose.msra.mxu0 0.0
    %118 = vmatprep.subr.mxu0 0.0
    %119 = vmatpush1.xpose.msra.mxu0 0.0
    %120 = vmatprep.subr.mxu0 0.0
    %121 = vmatpush1.xpose.msra.mxu0 0.0
    %122 = vmatprep.subr.mxu0 0.0
    %123 = vmatpush1.xpose.msra.mxu0 0.0
    %124 = vmatprep.subr.mxu0 0.0
    %125 = vmatpush1.xpose.msra.mxu0 0.0
    %126 = vmatprep.subr.mxu0 0.0
    %127 = vmatpush1.xpose.msra.mxu0 0.0
    %128 = vmatprep.mubr.f32.mxu0 0.0
    %129 = vmatmul.mubr.f32.gmra.mrb[0].mxu0 %v50
    %v130 = vpop.f32.mrb[0].mxu0
    %v131 = vadd.f32 %v31, %v130
    %v132 = vpop.f32.mrb[0].mxu0
    %133 = vmatprep.mubr.f32.mxu0 0.0
    %134 = vmatmul.mubr.f32.gmra.mrb[0].mxu0 %v53
    %v135 = vpop.f32.mrb[0].mxu0
    %v136 = vadd.f32 %v36, %v135
    %v137 = vpop.f32.mrb[0].mxu0
    %138 = vmatprep.mubr.f32.mxu0 0.0
    %139 = vmatmul.mubr.f32.gmra.mrb[0].mxu0 %v56
    %v140 = vpop.f32.mrb[0].mxu0
    %v141 = vadd.f32 %v41, %v140
    %v142 = vpop.f32.mrb[0].mxu0
    %143 = vmatprep.mubr.f32.mxu0 0.0
    %144 = vmatmul.mubr.f32.gmra.mrb[0].mxu0 %v59
    %v145 = vpop.f32.mrb[0].mxu0
    %v146 = vadd.f32 %v46, %v145
    %v147 = vpop.f32.mrb[0].mxu0
    %148 = vdwg.mxu0
    %v149 = vmax.f32 %v131, 0.0
    %v150 = vmax.f32 %v136, 0.0
    %v151 = vmax.f32 %v141, 0.0
    %v152 = vmax.f32 %v146, 0.0
    %153 = vset.pattern.permute.xlu0 1
    %154 = vperm.xlu0 %153, %v24
    %v155 = vpop.permute.xlu0 %154
    %157 = vset.pattern.permute.xlu0 1
    %158 = vperm.xlu0 %157, %v25
    %v159 = vpop.permute.xlu0 %158
    %161 = vset.pattern.permute.xlu0 1
    %162 = vperm.xlu0 %161, %v26
    %v163 = vpop.permute.xlu0 %162
    %165 = vset.pattern.permute.xlu0 1
    %166 = vperm.xlu0 %165, %v27
    %v167 = vpop.permute.xlu0 %166
    %v169 = vmul.f32 %v149, %v155
    %v170 = vmul.f32 %v150, %v159
    %v171 = vmul.f32 %v151, %v163
    %v172 = vmul.f32 %v152, %v167
    %vm173 = vcmask 64512
    %v174 = vsel %vm173, %v169, 0.0
    %v175 = vsel %vm173, %v170, 0.0
    %v176 = vadd.f32 %v174, %v175
    %v177 = vsel %vm173, %v171, 0.0
    %v178 = vadd.f32 %v176, %v177
    %v179 = vsel %vm173, %v172, 0.0
    %v180 = vadd.f32 %v178, %v179
    %v181 = vrot.slane %v180, 4
    %v182 = vadd.f32 %v180, %v181
    %v183 = vrot.slane %v182, 2
    %v184 = vadd.f32 %v182, %v183
    %v185 = vrot.slane %v184, 1
    %v186 = vadd.f32 %v184, %v185
    %s187 = sld [smem:[#allocation2]]
    %v188 = vstv %s187
    %v189 = vadd.f32 %v186, %v188
    %v190 = vxor.u32 %v189, 2147483648
    %v191 = vmul.f32 %v190, 1.442695
    %v192 = vpow.pop %v191
    %v193 = vadd.f32 %v192, 1.0
    %v194 = vrcp.pop %v193
    %v195 = vmul.f32 1.0, %v194
    %vm196 = vcmask 57344
    %197 = vst.msk [vmem:[#allocation3] sm:$0x1] %vm196, %v195
    // Predicated region
    $region18: #{tpu_custom_call.1} parent=1 // pred_check
      _
    $region19: #{tpu_custom_call.1} parent=1 // pred_check_branch
      %199 = sbr.rel (0) target = $region21
    $region20: #{tpu_custom_call.1} parent=1 // pred_region
      %s201 = ssub.s32 16, 16
      %202 = vsyncadd [#allocation4], %s201
      %s204 = sshll.u32 [#allocation3], 4
      %s205 = int_to_ptr.vmem [resolvable:$true] %s204
      %207 = dma.vmem_to_hbm [thread:$0]  %s205, 16, %s4, [#allocation4]
    $region21: #{tpu_custom_call.1} parent=1 // pred_fallthru
      _
    // Predicated region
    $region22: #{tpu_custom_call.1} parent=1 // pred_check
      _
    $region23: #{tpu_custom_call.1} parent=1 // pred_check_branch
      %209 = sbr.rel (0) target = $region25
    $region24: #{tpu_custom_call.1} parent=1 // pred_region
      %210 = dma.done [#allocation4], 16
    $region25: #{tpu_custom_call.1} parent=1 // pred_fallthru
      _
    %211 = vsyncpa [#allocation4], 1

</llo_original>
